<compile_context>
chip_gen: v6e
topology: v6e:2x2x1
jax: 0.10.0
libtpu: 0.0.40
codegen_flags: <defaults>
</compile_context>

<pallas_src>
import functools

import jax
import jax.numpy as jnp
from jax import lax
from jax.experimental import pallas as pl
from jax.experimental.pallas import tpu as pltpu


def _round_up(x, m):
    return (x + m - 1) // m * m


# --------------------------------------------------------------------------
# Pallas kernel
# --------------------------------------------------------------------------
def _dgcnn_kernel(*refs, cout_pad, kernel_size, dilation, base, shift,
                  fuse_taps, use_1x1, skip_connect):
    if skip_connect and use_1x1:
        (x0_ref, mask_ref, w_ref, bias_ref, w1_ref, b1_ref, o_ref, pad_ref) = refs
    else:
        (x0_ref, mask_ref, w_ref, bias_ref, o_ref, pad_ref) = refs
        w1_ref = b1_ref = None

    bt, L, cin = x0_ref.shape
    rows = bt * L
    cdt = pad_ref.dtype                 # MXU operand dtype (bf16 by default)
    lpad = pad_ref.shape[1]

    x0 = x0_ref[...]
    m = mask_ref[...].astype(jnp.float32)              # (bt, L, 1)
    xm = (x0.astype(jnp.float32) * m).astype(cdt)      # masked gated-conv input

    # Zero the pad rows of the persistent scratch every step (cheap) -- safe
    # under megacore sharding / arbitrary grid order; interior rows are fully
    # overwritten below each step.
    tail = lpad - base - L
    if base > 0:
        pad_ref[:, :base, :] = jnp.zeros((bt, base, cin), cdt)
    if tail > 0:
        pad_ref[:, base + L:, :] = jnp.zeros((bt, tail, cin), cdt)
    pad_ref[:, base:base + L, :] = xm

    def tap(k):
        s = shift + k * dilation
        return pad_ref[:, s:s + L, :]

    if fuse_taps:
        # im2col: K dilated taps concatenated on the lane axis -> one wide matmul.
        taps = [tap(k) for k in range(kernel_size)]
        lhs = taps[0] if kernel_size == 1 else jnp.concatenate(taps, axis=-1)
        lhs = lhs.reshape(rows, kernel_size * cin)
        z = jnp.dot(lhs, w_ref[...], preferred_element_type=jnp.float32)
    else:
        # per-tap accumulated matmuls: identical MXU FLOPs, no (rows, K*Cin) temp.
        z = jnp.dot(tap(0).reshape(rows, cin), w_ref[0],
                    preferred_element_type=jnp.float32)
        for k in range(1, kernel_size):
            z = z + jnp.dot(tap(k).reshape(rows, cin), w_ref[k],
                            preferred_element_type=jnp.float32)

    z = z + bias_ref[...]                # f32 bias, broadcast over rows
    xc = z[:, :cout_pad]                 # 128-lane-aligned slices: free split
    zg = z[:, cout_pad:]
    g = 1.0 / (1.0 + jnp.exp(-zg))       # exact sigmoid (exp on the EUP)

    m2 = m.reshape(rows, 1)
    if skip_connect:
        if use_1x1:
            # SamePaddingConv1d(kernel_size=1) == pointwise matmul on unmasked x0
            skip = jnp.dot(x0.astype(cdt).reshape(rows, cin), w1_ref[...],
                           preferred_element_type=jnp.float32) + b1_ref[...]
        else:
            skip = x0.astype(jnp.float32).reshape(rows, cin)
            if cout_pad > cin:
                skip = jnp.concatenate(
                    [skip, jnp.zeros((rows, cout_pad - cin), jnp.float32)], axis=-1)
        out = (skip + (xc - skip) * g) * m2       # == (skip*(1-g) + xc*g) * mask
    else:
        out = xc * g * m2

    o_ref[...] = out.reshape(bt, L, cout_pad).astype(o_ref.dtype)


# --------------------------------------------------------------------------
# Wrapper
# --------------------------------------------------------------------------
def dgcnn_forward(x0, mask, params, *, kernel_size, dilation_rate, out_channels,
                  skip_connect=True, compute_dtype=jnp.bfloat16,
                  batch_block=None, fuse_taps=None):
    B, L, Cin = x0.shape
    K, d, Cout = kernel_size, dilation_rate, out_channels
    use_1x1 = (Cout != Cin)
    Cout_pad = _round_up(Cout, 128)      # lane-dense output stores

    # SamePaddingConv1d padding logic (stride=1): pad=(K-1)*d//2 each side, plus
    # a single prepended zero when dilation is odd and kernel_size is even.
    pad = ((K - 1) * d) // 2
    prepend = 1 if (d % 2 == 1 and K % 2 == 0) else 0
    left_pad = pad + prepend

    itemsize_cd = jnp.dtype(compute_dtype).itemsize
    sub = 8 * max(1, 4 // itemsize_cd)   # packed-sublane granularity (16 for bf16)
    base = _round_up(left_pad, sub)      # aligned start of the real rows
    shift = base - left_pad              # tap k reads scratch rows [shift+k*d, +L)
    lpad = _round_up(base + L + max(0, (K - 1) * d - left_pad), sub)

    if fuse_taps is None:
        fuse_taps = (K * Cin) <= 256     # keep im2col only while the temp is small

    # Pack several batch elements per grid step when per-element work is tiny,
    # but keep >= 2 grid steps so both v7x TensorCores get work and the next
    # block's DMA overlaps compute.
    if batch_block is None:
        batch_block = 1
        if L % 8 == 0:                   # (bt, L) -> bt*L collapse stays layout-free
            for cand in range(1, B + 1):
                if B % cand == 0 and cand * L <= 1024 and (B == 1 or B // cand >= 2):
                    batch_block = cand
    assert B % batch_block == 0, (B, batch_block)
    bt = batch_block
    rows = bt * L

    f32 = jnp.float32
    # torch conv1d weight (2*Cout, Cin, K) -> (K, Cin, 2*Cout); content / gate
    # halves padded independently to Cout_pad so the in-kernel split of the one
    # fused accumulator is a free 128-lane-aligned slice.
    w_kio = jnp.transpose(params['conv_kernel'].astype(f32), (2, 1, 0))
    w_c = jnp.pad(w_kio[..., :Cout], ((0, 0), (0, 0), (0, Cout_pad - Cout)))
    w_g = jnp.pad(w_kio[..., Cout:], ((0, 0), (0, 0), (0, Cout_pad - Cout)))
    w_all = jnp.concatenate([w_c, w_g], axis=-1).astype(compute_dtype)  # (K,Cin,2Cp)
    if fuse_taps:
        w_all = w_all.reshape(K * Cin, 2 * Cout_pad)
        w_spec = pl.BlockSpec((K * Cin, 2 * Cout_pad), lambda b: (0, 0))
    else:
        w_spec = pl.BlockSpec((K, Cin, 2 * Cout_pad), lambda b: (0, 0, 0))

    bias = params['conv_bias'].astype(f32)
    b_c = jnp.pad(bias[:Cout], (0, Cout_pad - Cout))
    b_g = jnp.pad(bias[Cout:], (0, Cout_pad - Cout))
    bias_all = jnp.concatenate([b_c, b_g]).reshape(1, 2 * Cout_pad)     # f32

    operands = [x0, mask, w_all, bias_all]
    in_specs = [
        pl.BlockSpec((bt, L, Cin), lambda b: (b, 0, 0)),      # x0
        pl.BlockSpec((bt, L, 1), lambda b: (b, 0, 0)),        # mask
        w_spec,                                               # fused conv weight
        pl.BlockSpec((1, 2 * Cout_pad), lambda b: (0, 0)),    # fused bias (f32)
    ]
    if skip_connect and use_1x1:
        w1 = jnp.transpose(params['w1x1'][:, :, 0].astype(f32), (1, 0))   # (Cin, Cout)
        w1 = jnp.pad(w1, ((0, 0), (0, Cout_pad - Cout))).astype(compute_dtype)
        b1 = jnp.pad(params['b1x1'].astype(f32), (0, Cout_pad - Cout)).reshape(1, Cout_pad)
        operands += [w1, b1]
        in_specs += [pl.BlockSpec((Cin, Cout_pad), lambda b: (0, 0)),
                     pl.BlockSpec((1, Cout_pad), lambda b: (0, 0))]

    kernel = functools.partial(
        _dgcnn_kernel, cout_pad=Cout_pad, kernel_size=K, dilation=d,
        base=base, shift=shift, fuse_taps=fuse_taps, use_1x1=use_1x1,
        skip_connect=skip_connect)

    # --- scoped-VMEM sizing (generation aware) --------------------------------
    lane = lambda c: _round_up(max(c, 1), 128)
    itemsize_in = jnp.dtype(x0.dtype).itemsize
    est_vmem = (
        2 * bt * L * lane(Cin) * itemsize_in                  # x0 (double buffered)
        + 2 * bt * L * lane(1) * jnp.dtype(mask.dtype).itemsize
        + 2 * bt * L * Cout_pad * itemsize_in                 # output (double buffered)
        + bt * lpad * lane(Cin) * itemsize_cd                 # pad scratch
        + 2 * (K * Cin * 2 * Cout_pad * itemsize_cd + 2 * Cout_pad * 4)
        + (2 * (Cin * Cout_pad * itemsize_cd + Cout_pad * 4)
           if (skip_connect and use_1x1) else 0)
        + (rows * lane(K * Cin) * itemsize_cd if fuse_taps else 0)   # im2col temp
        + 8 * rows * Cout_pad * 4                             # f32 temporaries
    )
    cp_kwargs = dict(dimension_semantics=("parallel",))
    if est_vmem > 12 * 1024 * 1024:      # v5e default scoped VMEM is only 16 MiB
        try:
            phys = pltpu.get_tpu_info().vmem_capacity_bytes
        except Exception:
            phys = 64 * 1024 * 1024      # v7x physical size (most restrictive)
        cp_kwargs["vmem_limit_bytes"] = int(min(est_vmem * 3 // 2, phys * 4 // 5))

    out_full = pl.pallas_call(
        kernel,
        out_shape=jax.ShapeDtypeStruct((B, L, Cout_pad), x0.dtype),
        grid_spec=pltpu.PrefetchScalarGridSpec(
            num_scalar_prefetch=0,
            grid=(B // bt,),
            in_specs=in_specs,
            out_specs=pl.BlockSpec((bt, L, Cout_pad), lambda b: (b, 0, 0)),
            scratch_shapes=[pltpu.VMEM((bt, lpad, Cin), compute_dtype)],
        ),
        compiler_params=pltpu.CompilerParams(**cp_kwargs),
    )(*operands)
    return out_full[..., :Cout] if Cout_pad != Cout else out_full


# --------------------------------------------------------------------------
# Deterministic parameter init (mirrors the module's torch.randn shapes)
# --------------------------------------------------------------------------
def init_dgcnn_params(key, kernel_size, in_channels, out_channels):
    k1, k2, k3, k4 = jax.random.split(key, 4)
    params = {
        'conv_kernel': jax.random.normal(
            k1, (2 * out_channels, in_channels, kernel_size), jnp.float32),
        'conv_bias': jax.random.normal(k2, (2 * out_channels,), jnp.float32),
    }
    if out_channels != in_channels:
        params['w1x1'] = jax.random.normal(k3, (out_channels, in_channels, 1), jnp.float32)
        params['b1x1'] = jax.random.normal(k4, (out_channels,), jnp.float32)
    return params


# --------------------------------------------------------------------------
# Pure-JAX reference (matches the PyTorch forward) for verification.
# `compute_dtype` rounds the matmul operands the same way the kernel does so
# the comparison isolates structural correctness from bf16 quantization.
# --------------------------------------------------------------------------
def _same_padding_conv1d_ref(x_blc, weight_oik, bias_o, dilation):
    B, L, Cin = x_blc.shape
    K = weight_oik.shape[2]
    pad_rows = max(0, (K - 1) * dilation)
    x_ncl = jnp.transpose(x_blc, (0, 2, 1))
    if dilation % 2 == 1 and K % 2 == 0:
        x_ncl = jnp.concatenate([jnp.zeros((B, Cin, 1), x_ncl.dtype), x_ncl], axis=2)
    out = lax.conv_general_dilated(
        x_ncl, weight_oik, window_strides=(1,),
        padding=[(pad_rows // 2, pad_rows // 2)], rhs_dilation=(dilation,),
        dimension_numbers=('NCH', 'OIH', 'NCH'),
        precision=lax.Precision.HIGHEST)
    out = out + bias_o[None, :, None]
    return jnp.transpose(out, (0, 2, 1))


def dgcnn_reference(x0, mask, params, *, kernel_size, dilation_rate, out_channels,
                    skip_connect=True, compute_dtype=jnp.float32):
    def rnd(a):
        return a.astype(compute_dtype).astype(jnp.float32)

    x = rnd(x0 * mask)
    xg = _same_padding_conv1d_ref(x, rnd(params['conv_kernel']),
                                  params['conv_bias'], dilation_rate)
    xc, g = xg[:, :, :out_channels], xg[:, :, out_channels:]
    g = jax.nn.sigmoid(g)
    if skip_connect:
        if out_channels != x0.shape[-1]:
            skip = _same_padding_conv1d_ref(rnd(x0), rnd(params['w1x1']),
                                            params['b1x1'], 1)
        else:
            skip = x0
        return (skip * (1.0 - g) + xc * g) * mask
    return xc * g * mask


# --------------------------------------------------------------------------
if __name__ == "__main__":
    key = jax.random.PRNGKey(0)

    # Three small configs covering: 1x1 skip (Cout != Cin), identity skip with the
    # odd-dilation/even-kernel prepend branch, and no-skip with the per-tap
    # (non-im2col) matmul path and even dilation.
    configs = [
        dict(B=2, L=16, cin=8,  cout=16, K=3, d=1, skip=True,  fuse=None),
        dict(B=2, L=16, cin=16, cout=16, K=2, d=3, skip=True,  fuse=None),
        dict(B=2, L=16, cin=8,  cout=8,  K=3, d=2, skip=False, fuse=False),
    ]

    for i, cfg in enumerate(configs):
        key, kx, km, kp = jax.random.split(key, 4)
        B, L, cin, cout = cfg['B'], cfg['L'], cfg['cin'], cfg['cout']
        x0 = jax.random.normal(kx, (B, L, cin), jnp.float32)
        mask = (jax.random.uniform(km, (B, L, 1)) > 0.2).astype(jnp.float32)
        params = init_dgcnn_params(kp, cfg['K'], cin, cout)

        common = dict(kernel_size=cfg['K'], dilation_rate=cfg['d'],
                      out_channels=cout, skip_connect=cfg['skip'])

        out = dgcnn_forward(x0, mask, params, fuse_taps=cfg['fuse'], **common)
        out = jax.block_until_ready(out)
        assert out.shape == (B, L, cout), (i, out.shape)

        # Reference with bf16-rounded matmul operands (same rounding as the
        # kernel's default compute dtype) -> differences are accumulation-order /
        # transcendental-level only, so the tolerance can stay tight.
        ref = dgcnn_reference(x0, mask, params, compute_dtype=jnp.bfloat16, **common)
        ref = jax.block_until_ready(ref)
        err = float(jnp.max(jnp.abs(out - ref)))
        assert jnp.allclose(out, ref, atol=2e-3, rtol=2e-3), (i, err)

    print("KERNEL_OK")
</pallas_src>

<mosaic_0001>
module attributes {stable_mosaic.version = 11 : i64} {
  func.func @_dgcnn_kernel(%arg0: i32, %arg1: memref<1x16x8xf32, #tpu.memory_space<vmem>>, %arg2: memref<1x16x1xf32, #tpu.memory_space<vmem>>, %arg3: memref<24x256xbf16, #tpu.memory_space<vmem>>, %arg4: memref<1x256xf32, #tpu.memory_space<vmem>>, %arg5: memref<8x128xbf16, #tpu.memory_space<vmem>>, %arg6: memref<1x128xf32, #tpu.memory_space<vmem>>, %arg7: memref<1x16x128xf32, #tpu.memory_space<vmem>>, %arg8: memref<1x48x8xbf16, #tpu.memory_space<vmem>>) attributes {dimension_semantics = [#tpu.dimension_semantics<parallel>], iteration_bounds = array<i64: 2>, scalar_prefetch = 0 : i64, scratch_operands = 1 : i64, tpu.core_type = #tpu.core_type<tc>, window_params = [{transform_indices = @transform_0, window_bounds = array<i64: 1, 16, 8>}, {transform_indices = @transform_1, window_bounds = array<i64: 1, 16, 1>}, {pipeline_mode = #tpu.pipeline_mode<synchronous>, transform_indices = @transform_2, window_bounds = array<i64: 24, 256>}, {pipeline_mode = #tpu.pipeline_mode<synchronous>, transform_indices = @transform_3, window_bounds = array<i64: 1, 256>}, {pipeline_mode = #tpu.pipeline_mode<synchronous>, transform_indices = @transform_4, window_bounds = array<i64: 8, 128>}, {pipeline_mode = #tpu.pipeline_mode<synchronous>, transform_indices = @transform_5, window_bounds = array<i64: 1, 128>}, {transform_indices = @transform_6, window_bounds = array<i64: 1, 16, 128>}]} {
    %c0 = arith.constant 0 : index
    %c0_0 = arith.constant 0 : index
    %c0_1 = arith.constant 0 : index
    %0 = vector.load %arg1[%c0, %c0_0, %c0_1] : memref<1x16x8xf32, #tpu.memory_space<vmem>>, vector<1x16x8xf32>
    %c0_2 = arith.constant 0 : index
    %c0_3 = arith.constant 0 : index
    %c0_4 = arith.constant 0 : index
    %1 = vector.load %arg2[%c0_2, %c0_3, %c0_4] : memref<1x16x1xf32, #tpu.memory_space<vmem>>, vector<1x16x1xf32>
    %2 = vector.broadcast %1 : vector<1x16x1xf32> to vector<1x16x8xf32>
    %3 = arith.mulf %0, %2 : vector<1x16x8xf32>
    %4 = arith.truncf %3 : vector<1x16x8xf32> to vector<1x16x8xbf16>
    %cst = arith.constant 0.000000e+00 : bf16
    %5 = vector.broadcast %cst : bf16 to vector<1x16x8xbf16>
    %c0_5 = arith.constant 0 : index
    %c0_6 = arith.constant 0 : index
    %c0_7 = arith.constant 0 : index
    %6 = vector.load %arg8[%c0_5, %c0_6, %c0_7] : memref<1x48x8xbf16, #tpu.memory_space<vmem>>, vector<1x16x8xbf16>
    tpu.vector_store %arg8[%c0_5, %c0_6, %c0_7], %5 {strides = array<i32>} : memref<1x48x8xbf16, #tpu.memory_space<vmem>>, vector<1x16x8xbf16>,
    %cst_8 = arith.constant 0.000000e+00 : bf16
    %7 = vector.broadcast %cst_8 : bf16 to vector<1x16x8xbf16>
    %c0_9 = arith.constant 0 : index
    %c32 = arith.constant 32 : index
    %c0_10 = arith.constant 0 : index
    %8 = vector.load %arg8[%c0_9, %c32, %c0_10] : memref<1x48x8xbf16, #tpu.memory_space<vmem>>, vector<1x16x8xbf16>
    tpu.vector_store %arg8[%c0_9, %c32, %c0_10], %7 {strides = array<i32>} : memref<1x48x8xbf16, #tpu.memory_space<vmem>>, vector<1x16x8xbf16>,
    %c0_11 = arith.constant 0 : index
    %c16 = arith.constant 16 : index
    %c0_12 = arith.constant 0 : index
    %9 = vector.load %arg8[%c0_11, %c16, %c0_12] : memref<1x48x8xbf16, #tpu.memory_space<vmem>>, vector<1x16x8xbf16>
    tpu.vector_store %arg8[%c0_11, %c16, %c0_12], %4 {strides = array<i32>} : memref<1x48x8xbf16, #tpu.memory_space<vmem>>, vector<1x16x8xbf16>,
    %c0_13 = arith.constant 0 : index
    %c15 = arith.constant 15 : index
    %c0_14 = arith.constant 0 : index
    %10 = vector.load %arg8[%c0_13, %c15, %c0_14] : memref<1x48x8xbf16, #tpu.memory_space<vmem>>, vector<1x16x8xbf16>
    %c0_15 = arith.constant 0 : index
    %c16_16 = arith.constant 16 : index
    %c0_17 = arith.constant 0 : index
    %11 = vector.load %arg8[%c0_15, %c16_16, %c0_17] : memref<1x48x8xbf16, #tpu.memory_space<vmem>>, vector<1x16x8xbf16>
    %c0_18 = arith.constant 0 : index
    %c17 = arith.constant 17 : index
    %c0_19 = arith.constant 0 : index
    %12 = vector.load %arg8[%c0_18, %c17, %c0_19] : memref<1x48x8xbf16, #tpu.memory_space<vmem>>, vector<1x16x8xbf16>
    %13 = tpu.concatenate %10, %11, %12 in 2 : vector<1x16x8xbf16>, vector<1x16x8xbf16>, vector<1x16x8xbf16> -> vector<1x16x24xbf16>
    %14 = vector.shape_cast %13 : vector<1x16x24xbf16> to vector<16x24xbf16>
    %c0_20 = arith.constant 0 : index
    %c0_21 = arith.constant 0 : index
    %15 = vector.load %arg3[%c0_20, %c0_21] : memref<24x256xbf16, #tpu.memory_space<vmem>>, vector<24x256xbf16>
    %cst_22 = arith.constant dense<0.000000e+00> : vector<16x256xf32>
    %16 = tpu.matmul %14, %15, %cst_22 {dimension_numbers = #tpu.dot_dimension_numbers<[1], [0], [0], [1], [0, 0, 1, 1], [], []>} : vector<16x24xbf16>, vector<24x256xbf16>, vector<16x256xf32> -> vector<16x256xf32>
    %c0_23 = arith.constant 0 : index
    %c0_24 = arith.constant 0 : index
    %17 = vector.load %arg4[%c0_23, %c0_24] : memref<1x256xf32, #tpu.memory_space<vmem>>, vector<1x256xf32>
    %18 = vector.broadcast %17 : vector<1x256xf32> to vector<16x256xf32>
    %19 = arith.addf %16, %18 : vector<16x256xf32>
    %20 = vector.extract_strided_slice %19 {offsets = [0, 0], sizes = [16, 128], strides = [1, 1]} : vector<16x256xf32> to vector<16x128xf32>
    %21 = vector.extract_strided_slice %19 {offsets = [0, 128], sizes = [16, 128], strides = [1, 1]} : vector<16x256xf32> to vector<16x128xf32>
    %cst_25 = arith.constant 0.000000e+00 : f32
    %22 = vector.broadcast %cst_25 : f32 to vector<16x128xf32>
    %23 = arith.subf %22, %21 : vector<16x128xf32>
    %24 = math.exp %23 : vector<16x128xf32>
    %cst_26 = arith.constant 1.000000e+00 : f32
    %25 = vector.broadcast %cst_26 : f32 to vector<16x128xf32>
    %26 = arith.addf %25, %24 : vector<16x128xf32>
    %cst_27 = arith.constant 1.000000e+00 : f32
    %27 = vector.broadcast %cst_27 : f32 to vector<16x128xf32>
    %28 = arith.divf %27, %26 : vector<16x128xf32>
    %29 = vector.shape_cast %1 : vector<1x16x1xf32> to vector<16x1xf32>
    %30 = arith.truncf %0 : vector<1x16x8xf32> to vector<1x16x8xbf16>
    %31 = vector.shape_cast %30 : vector<1x16x8xbf16> to vector<16x8xbf16>
    %c0_28 = arith.constant 0 : index
    %c0_29 = arith.constant 0 : index
    %32 = vector.load %arg5[%c0_28, %c0_29] : memref<8x128xbf16, #tpu.memory_space<vmem>>, vector<8x128xbf16>
    %cst_30 = arith.constant dense<0.000000e+00> : vector<16x128xf32>
    %33 = tpu.matmul %31, %32, %cst_30 {dimension_numbers = #tpu.dot_dimension_numbers<[1], [0], [0], [1], [0, 0, 1, 1], [], []>} : vector<16x8xbf16>, vector<8x128xbf16>, vector<16x128xf32> -> vector<16x128xf32>
    %c0_31 = arith.constant 0 : index
    %c0_32 = arith.constant 0 : index
    %34 = vector.load %arg6[%c0_31, %c0_32] : memref<1x128xf32, #tpu.memory_space<vmem>>, vector<1x128xf32>
    %35 = vector.broadcast %34 : vector<1x128xf32> to vector<16x128xf32>
    %36 = arith.addf %33, %35 : vector<16x128xf32>
    %37 = arith.subf %20, %36 : vector<16x128xf32>
    %38 = arith.mulf %37, %28 : vector<16x128xf32>
    %39 = arith.addf %36, %38 : vector<16x128xf32>
    %40 = vector.broadcast %29 : vector<16x1xf32> to vector<16x128xf32>
    %41 = arith.mulf %39, %40 : vector<16x128xf32>
    %42 = vector.shape_cast %41 : vector<16x128xf32> to vector<1x16x128xf32>
    %c0_33 = arith.constant 0 : index
    %c0_34 = arith.constant 0 : index
    %c0_35 = arith.constant 0 : index
    %43 = vector.load %arg7[%c0_33, %c0_34, %c0_35] : memref<1x16x128xf32, #tpu.memory_space<vmem>>, vector<1x16x128xf32>
    tpu.vector_store %arg7[%c0_33, %c0_34, %c0_35], %42 {strides = array<i32>} : memref<1x16x128xf32, #tpu.memory_space<vmem>>, vector<1x16x128xf32>,
    return
  }
  func.func @transform_0(%arg0: i32) -> (i32, i32, i32) {
    %c0_i32 = arith.constant 0 : i32
    %c0_i32_0 = arith.constant 0 : i32
    %c0_i32_1 = arith.constant 0 : i32
    return %arg0, %c0_i32, %c0_i32_0 : i32, i32, i32
  }
  func.func @transform_1(%arg0: i32) -> (i32, i32, i32) {
    %c0_i32 = arith.constant 0 : i32
    %c0_i32_0 = arith.constant 0 : i32
    %c0_i32_1 = arith.constant 0 : i32
    return %arg0, %c0_i32, %c0_i32_0 : i32, i32, i32
  }
  func.func @transform_2(%arg0: i32) -> (i32, i32) {
    %c0_i32 = arith.constant 0 : i32
    %c0_i32_0 = arith.constant 0 : i32
    %c0_i32_1 = arith.constant 0 : i32
    return %c0_i32, %c0_i32_0 : i32, i32
  }
  func.func @transform_3(%arg0: i32) -> (i32, i32) {
    %c0_i32 = arith.constant 0 : i32
    %c0_i32_0 = arith.constant 0 : i32
    %c0_i32_1 = arith.constant 0 : i32
    return %c0_i32, %c0_i32_0 : i32, i32
  }
  func.func @transform_4(%arg0: i32) -> (i32, i32) {
    %c0_i32 = arith.constant 0 : i32
    %c0_i32_0 = arith.constant 0 : i32
    %c0_i32_1 = arith.constant 0 : i32
    return %c0_i32, %c0_i32_0 : i32, i32
  }
  func.func @transform_5(%arg0: i32) -> (i32, i32) {
    %c0_i32 = arith.constant 0 : i32
    %c0_i32_0 = arith.constant 0 : i32
    %c0_i32_1 = arith.constant 0 : i32
    return %c0_i32, %c0_i32_0 : i32, i32
  }
  func.func @transform_6(%arg0: i32) -> (i32, i32, i32) {
    %c0_i32 = arith.constant 0 : i32
    %c0_i32_0 = arith.constant 0 : i32
    %c0_i32_1 = arith.constant 0 : i32
    return %arg0, %c0_i32, %c0_i32_0 : i32, i32, i32
  }
}

</mosaic_0001>

<llo_original>
// kernel: tpu_custom_call.1
$region0: #{tpu_custom_call.1}
  #allocation0 [shape = 'u32[]', space=smem, size = 0x4, offset = 0x4, fixed_abs, tag = 'smem constant byte address 0x4 - core index']
  #allocation1 [shape = 'u32[144,128]{1,0:T(1,128)}', space=vmem, size = 0x12000, scoped, tag = 'internal scratch']
  #allocation2 [shape = 'bf16[1,48,8]{2,1,0:T(8,128)(2,1)}', space=vmem, size = 0x3000, scoped, tag = 'scratch operand']
  %s0 = inlined_call_operand.vmem [shape: f32[2,16,8], index: 0, kind: input, shape index: {}]
  %s1 = inlined_call_operand.vmem [shape: f32[2,16,1], index: 1, kind: input, shape index: {}]
  %s2 = inlined_call_operand.vmem [shape: bf16[24,256], index: 2, kind: input, shape index: {}]
  %s3 = inlined_call_operand.vmem [shape: f32[1,256], index: 3, kind: input, shape index: {}]
  %s4 = inlined_call_operand.vmem [shape: bf16[8,128], index: 4, kind: input, shape index: {}]
  %s5 = inlined_call_operand.vmem [shape: f32[1,128], index: 5, kind: input, shape index: {}]
  %s6 = inlined_call_operand.hbm [shape: f32[2,16,128], index: 6, kind: output, shape index: {}]
  %s7 = sld [smem:[#allocation0]]
  $region57: #{tpu_custom_call.1} parent=0
    _
  %s9 = ssub.s32 1, %s7
  %s10 = scalar_select 0, %s9, %s7
  $region1: #{tpu_custom_call.1} parent=0
    #allocation3 [shape = 'u8[16384]{0}', space=vmem, size = 0x4000, scoped, tag = 'output window, operand 0']
    #allocation4 [shape = 's32[2]{0}', space=sflag, size = 0x8, scoped, tag = 'scoped memory for tpu_custom_call.1']
    %11 = vsyncpa [#allocation4], 0
    %s12 = scalar_lea.sflag [#allocation4], 1
    %13 = vsyncpa %s12, 0
    loop: start=0, step=1, limit=4
    $region2: #{tpu_custom_call.1} parent=1 // loop_pre_header
      _
    $region3: #{tpu_custom_call.1} parent=1 // loop_header
      %s15 = sphi 0, %s19
      %p16 = scmp.ge.s32.totalorder %s15, 4
      %s25 = sphi 0, %s27
      %s28 = sphi 0, %s25
      %s29 = sphi 0, %s28
      %s45 = sphi 0, %s29
      %s51 = sphi 0, %s53
      %s54 = sphi 0, %s51
      %s55 = sphi 0, %s54
      %s71 = sphi 0, %s55
      %s75 = sphi 0, %s75
      %s77 = sphi 0, %s75
      %s78 = sphi 0, %s77
      %s92 = sphi 0, %s78
      %s96 = sphi 0, %s96
      %s98 = sphi 0, %s96
      %s99 = sphi 0, %s98
      %s113 = sphi 0, %s99
      %s117 = sphi 0, %s117
      %s119 = sphi 0, %s117
      %s120 = sphi 0, %s119
      %s134 = sphi 0, %s120
      %s138 = sphi 0, %s138
      %s140 = sphi 0, %s138
      %s141 = sphi 0, %s140
      %s155 = sphi 0, %s141
      %s161 = sphi 0, %s163
      %s164 = sphi 0, %s161
      %s165 = sphi 0, %s164
      %s181 = sphi 0, %s165
    $region4: #{tpu_custom_call.1} parent=1 // loop_header_branch
      %18 = sbr.rel (%p16) target = $region8
    $region5: #{tpu_custom_call.1} parent=1 // loop_body
      %s20 = ssub.s32 %s15, 1
      %s21 = ssub.s32 %s15, 2
      %s22 = sadd.s32 %s15, 1
      %s23 = ssub.s32 %s15, %s22
      %p24 = scmp.eq.s32.totalorder %s23, 0
      %s26 = sadd.s32 %s25, 1
      %s27 = scalar_select %p24, %s25, %s26
      %p30 = pneg %p24
      %p31 = scmp.eq.s32.totalorder %s15, 1
      %p32 = por %p30, %p31
      %p33 = scmp.ne.s32.totalorder %s25, %s28
      %p34 = scmp.eq.s32.totalorder %s15, 0
      %p35 = por %p33, %p34
      %p36 = scmp.ne.s32.totalorder %s25, %s28
      %p37 = scmp.eq.s32.totalorder %s20, 1
      %p38 = por %p36, %p37
      %p39 = scmp.ne.s32.totalorder %s28, %s29
      %p40 = scmp.eq.s32.totalorder %s20, 0
      %p41 = por %p39, %p40
      %p42 = scmp.ne.s32.totalorder %s28, %s29
      %p43 = scmp.eq.s32.totalorder %s21, 1
      %p44 = por %p42, %p43
      %p46 = scmp.ne.s32.totalorder %s29, %s45
      %p47 = scmp.eq.s32.totalorder %s21, 0
      %p48 = por %p46, %p47
      %s49 = ssub.s32 %s15, %s22
      %p50 = scmp.eq.s32.totalorder %s49, 0
      %s52 = sadd.s32 %s51, 1
      %s53 = scalar_select %p50, %s51, %s52
      %p56 = pneg %p50
      %p57 = scmp.eq.s32.totalorder %s15, 1
      %p58 = por %p56, %p57
      %p59 = scmp.ne.s32.totalorder %s51, %s54
      %p60 = scmp.eq.s32.totalorder %s15, 0
      %p61 = por %p59, %p60
      %p62 = scmp.ne.s32.totalorder %s51, %s54
      %p63 = scmp.eq.s32.totalorder %s20, 1
      %p64 = por %p62, %p63
      %p65 = scmp.ne.s32.totalorder %s54, %s55
      %p66 = scmp.eq.s32.totalorder %s20, 0
      %p67 = por %p65, %p66
      %p68 = scmp.ne.s32.totalorder %s54, %s55
      %p69 = scmp.eq.s32.totalorder %s21, 1
      %p70 = por %p68, %p69
      %p72 = scmp.ne.s32.totalorder %s55, %s71
      %p73 = scmp.eq.s32.totalorder %s21, 0
      %p74 = por %p72, %p73
      %s76 = sadd.s32 %s75, 1
      %p79 = scmp.eq.s32.totalorder %s15, 1
      %p80 = scmp.ne.s32.totalorder %s75, %s77
      %p81 = scmp.eq.s32.totalorder %s15, 0
      %p82 = por %p80, %p81
      %p83 = scmp.ne.s32.totalorder %s75, %s77
      %p84 = scmp.eq.s32.totalorder %s20, 1
      %p85 = por %p83, %p84
      %p86 = scmp.ne.s32.totalorder %s77, %s78
      %p87 = scmp.eq.s32.totalorder %s20, 0
      %p88 = por %p86, %p87
      %p89 = scmp.ne.s32.totalorder %s77, %s78
      %p90 = scmp.eq.s32.totalorder %s21, 1
      %p91 = por %p89, %p90
      %p93 = scmp.ne.s32.totalorder %s78, %s92
      %p94 = scmp.eq.s32.totalorder %s21, 0
      %p95 = por %p93, %p94
      %s97 = sadd.s32 %s96, 1
      %p100 = scmp.eq.s32.totalorder %s15, 1
      %p101 = scmp.ne.s32.totalorder %s96, %s98
      %p102 = scmp.eq.s32.totalorder %s15, 0
      %p103 = por %p101, %p102
      %p104 = scmp.ne.s32.totalorder %s96, %s98
      %p105 = scmp.eq.s32.totalorder %s20, 1
      %p106 = por %p104, %p105
      %p107 = scmp.ne.s32.totalorder %s98, %s99
      %p108 = scmp.eq.s32.totalorder %s20, 0
      %p109 = por %p107, %p108
      %p110 = scmp.ne.s32.totalorder %s98, %s99
      %p111 = scmp.eq.s32.totalorder %s21, 1
      %p112 = por %p110, %p111
      %p114 = scmp.ne.s32.totalorder %s99, %s113
      %p115 = scmp.eq.s32.totalorder %s21, 0
      %p116 = por %p114, %p115
      %s118 = sadd.s32 %s117, 1
      %p121 = scmp.eq.s32.totalorder %s15, 1
      %p122 = scmp.ne.s32.totalorder %s117, %s119
      %p123 = scmp.eq.s32.totalorder %s15, 0
      %p124 = por %p122, %p123
      %p125 = scmp.ne.s32.totalorder %s117, %s119
      %p126 = scmp.eq.s32.totalorder %s20, 1
      %p127 = por %p125, %p126
      %p128 = scmp.ne.s32.totalorder %s119, %s120
      %p129 = scmp.eq.s32.totalorder %s20, 0
      %p130 = por %p128, %p129
      %p131 = scmp.ne.s32.totalorder %s119, %s120
      %p132 = scmp.eq.s32.totalorder %s21, 1
      %p133 = por %p131, %p132
      %p135 = scmp.ne.s32.totalorder %s120, %s134
      %p136 = scmp.eq.s32.totalorder %s21, 0
      %p137 = por %p135, %p136
      %s139 = sadd.s32 %s138, 1
      %p142 = scmp.eq.s32.totalorder %s15, 1
      %p143 = scmp.ne.s32.totalorder %s138, %s140
      %p144 = scmp.eq.s32.totalorder %s15, 0
      %p145 = por %p143, %p144
      %p146 = scmp.ne.s32.totalorder %s138, %s140
      %p147 = scmp.eq.s32.totalorder %s20, 1
      %p148 = por %p146, %p147
      %p149 = scmp.ne.s32.totalorder %s140, %s141
      %p150 = scmp.eq.s32.totalorder %s20, 0
      %p151 = por %p149, %p150
      %p152 = scmp.ne.s32.totalorder %s140, %s141
      %p153 = scmp.eq.s32.totalorder %s21, 1
      %p154 = por %p152, %p153
      %p156 = scmp.ne.s32.totalorder %s141, %s155
      %p157 = scmp.eq.s32.totalorder %s21, 0
      %p158 = por %p156, %p157
      %s159 = ssub.s32 %s15, %s22
      %p160 = scmp.eq.s32.totalorder %s159, 0
      %s162 = sadd.s32 %s161, 1
      %s163 = scalar_select %p160, %s161, %s162
      %p166 = pneg %p160
      %p167 = scmp.eq.s32.totalorder %s15, 1
      %p168 = por %p166, %p167
      %p169 = scmp.ne.s32.totalorder %s161, %s164
      %p170 = scmp.eq.s32.totalorder %s15, 0
      %p171 = por %p169, %p170
      %p172 = scmp.ne.s32.totalorder %s161, %s164
      %p173 = scmp.eq.s32.totalorder %s20, 1
      %p174 = por %p172, %p173
      %p175 = scmp.ne.s32.totalorder %s164, %s165
      %p176 = scmp.eq.s32.totalorder %s20, 0
      %p177 = por %p175, %p176
      %p178 = scmp.ne.s32.totalorder %s164, %s165
      %p179 = scmp.eq.s32.totalorder %s21, 1
      %p180 = por %p178, %p179
      %p182 = scmp.ne.s32.totalorder %s165, %s181
      %p183 = scmp.eq.s32.totalorder %s21, 0
      %p184 = por %p182, %p183
      %p185 = scmp.le.s32.totalorder 1, %s15
      %p186 = scmp.lt.s32.totalorder %s15, 3
      %p187 = pnand %p185, %p186
      %p188 = pneg %p187
      // Predicated region
      $region9: #{tpu_custom_call.1} parent=5 // pred_check
        _
      $region10: #{tpu_custom_call.1} parent=5 // pred_check_branch
        %190 = sbr.rel (%p187) target = $region12
      $region11: #{tpu_custom_call.1} parent=5 // pred_region
        %s191 = ssub.s32 %s15, 1
        // Predicated region
        $region13: #{tpu_custom_call.1} parent=11 // pred_check
          %p192 = pneg %p88
        $region14: #{tpu_custom_call.1} parent=11 // pred_check_branch
          %194 = sbr.rel (%p192) target = $region16
        $region15: #{tpu_custom_call.1} parent=11 // pred_region
          _
        $region16: #{tpu_custom_call.1} parent=11 // pred_fallthru
          _
        // Predicated region
        $region17: #{tpu_custom_call.1} parent=11 // pred_check
          %p195 = pneg %p109
        $region18: #{tpu_custom_call.1} parent=11 // pred_check_branch
          %197 = sbr.rel (%p195) target = $region20
        $region19: #{tpu_custom_call.1} parent=11 // pred_region
          _
        $region20: #{tpu_custom_call.1} parent=11 // pred_fallthru
          _
        // Predicated region
        $region21: #{tpu_custom_call.1} parent=11 // pred_check
          %p198 = pneg %p130
        $region22: #{tpu_custom_call.1} parent=11 // pred_check_branch
          %200 = sbr.rel (%p198) target = $region24
        $region23: #{tpu_custom_call.1} parent=11 // pred_region
          _
        $region24: #{tpu_custom_call.1} parent=11 // pred_fallthru
          _
        // Predicated region
        $region25: #{tpu_custom_call.1} parent=11 // pred_check
          %p201 = pneg %p151
        $region26: #{tpu_custom_call.1} parent=11 // pred_check_branch
          %203 = sbr.rel (%p201) target = $region28
        $region27: #{tpu_custom_call.1} parent=11 // pred_region
          _
        $region28: #{tpu_custom_call.1} parent=11 // pred_fallthru
          _
      $region12: #{tpu_custom_call.1} parent=5 // pred_fallthru
        _
      %p204 = scmp.lt.s32.totalorder %s15, 2
      // Predicated region
      $region29: #{tpu_custom_call.1} parent=5 // pred_check
        %p205 = pneg %p204
      $region30: #{tpu_custom_call.1} parent=5 // pred_check_branch
        %207 = sbr.rel (%p205) target = $region32
      $region31: #{tpu_custom_call.1} parent=5 // pred_region
        // Predicated region
        $region33: #{tpu_custom_call.1} parent=31 // pred_check
          %p208 = pneg %p35
        $region34: #{tpu_custom_call.1} parent=31 // pred_check_branch
          %210 = sbr.rel (%p208) target = $region36
        $region35: #{tpu_custom_call.1} parent=31 // pred_region
          %p211 = scmp.lt.s32.totalorder %s15, 1
          %s212 = scalar_select %p211, %s15, 1
          %s213 = smul.addr %s212, 2
          %s214 = smul.addr %s213, 8
          %s215 = scalar_lea.vmem %s0, %s214
        $region36: #{tpu_custom_call.1} parent=31 // pred_fallthru
          _
        // Predicated region
        $region37: #{tpu_custom_call.1} parent=31 // pred_check
          %p216 = pneg %p61
        $region38: #{tpu_custom_call.1} parent=31 // pred_check_branch
          %218 = sbr.rel (%p216) target = $region40
        $region39: #{tpu_custom_call.1} parent=31 // pred_region
          %p219 = scmp.lt.s32.totalorder %s15, 1
          %s220 = scalar_select %p219, %s15, 1
          %s221 = smul.addr %s220, 2
          %s222 = smul.addr %s221, 8
          %s223 = scalar_lea.vmem %s1, %s222
        $region40: #{tpu_custom_call.1} parent=31 // pred_fallthru
          _
      $region32: #{tpu_custom_call.1} parent=5 // pred_fallthru
        _
      %p224 = scmp.le.s32.totalorder 1, %s15
      %p225 = scmp.lt.s32.totalorder %s15, 3
      %p226 = pnand %p224, %p225
      %p227 = pneg %p226
      // Predicated region
      $region41: #{tpu_custom_call.1} parent=5 // pred_check
        _
      $region42: #{tpu_custom_call.1} parent=5 // pred_check_branch
        %229 = sbr.rel (%p226) target = $region44
      $region43: #{tpu_custom_call.1} parent=5 // pred_region
        %s230 = ssub.s32 %s15, 1
        %p231 = scmp.lt.s32.totalorder %s20, 1
        %s232 = scalar_select %p231, %s20, 1
        %s233 = smul.addr %s232, 2
        %s234 = smul.addr %s233, 8
        %s235 = scalar_lea.vmem %s0, %s234
        %p236 = pneg %p41
        %p237 = pneg %p38
        %p238 = scmp.lt.s32.totalorder %s20, 1
        %s239 = scalar_select %p238, %s20, 1
        %s240 = smul.addr %s239, 2
        %s241 = smul.addr %s240, 8
        %s242 = scalar_lea.vmem %s1, %s241
        %p243 = pneg %p67
        %p244 = pneg %p64
        %p245 = pneg %p88
        %p246 = pneg %p85
        %p247 = pneg %p109
        %p248 = pneg %p106
        %p249 = pneg %p130
        %p250 = pneg %p127
        %p251 = pneg %p151
        %p252 = pneg %p148
        %p253 = pneg %p177
        %p254 = pneg %p174
        %s255 = sand.u32 %s164, 1
        %s256 = scalar_lea.sflag [#allocation4], %s255
        %s257 = sand.u32 %s164, 1
        %s258 = smul.addr %s257, 16
        %s259 = scalar_lea.vmem [#allocation3], %s258
        %p260 = scmp.lt.s32.totalorder %s20, 1
        %s261 = scalar_select %p260, %s20, 1
        %s262 = smul.addr %s261, 2
        %s263 = smul.addr %s262, 8
        %s264 = scalar_lea.vmem %s0, %s263
        %p265 = scmp.lt.s32.totalorder %s20, 1
        %s266 = scalar_select %p265, %s20, 1
        %s267 = smul.addr %s266, 2
        %s268 = smul.addr %s267, 8
        %s269 = scalar_lea.vmem %s1, %s268
        %v271 = vld [vmem:[%s264] sm:$0xff]
        %v272 = vld [vmem:[%s264 + $0x8] sm:$0xff]
        %v273 = vld [vmem:[%s269] sm:$0xff]
        %v274 = vld [vmem:[%s269 + $0x8] sm:$0xff]
        %276 = vset.pattern.permute.xlu0 0
        %277 = vperm.xlu0 %276, %v273
        %v278 = vpop.permute.xlu0 %277
        %281 = vset.pattern.permute.xlu0 0
        %282 = vperm.xlu0 %281, %v274
        %v283 = vpop.permute.xlu0 %282
        %v285 = vmul.f32 %v271, %v278
        %v286 = vmul.f32 %v272, %v283
        %v287 = vpack.c.bf16 %v286, %v285
        %vm288 = vcmask 60416
        %289 = vst.msk [vmem:[#allocation2] sm:$0xf] %vm288, 0
        %290 = vst.msk [vmem:[#allocation2 + $0x4] sm:$0xf] %vm288, 0
        %291 = vst.msk [vmem:[#allocation2 + $0x10] sm:$0xf] %vm288, 0
        %292 = vst.msk [vmem:[#allocation2 + $0x14] sm:$0xf] %vm288, 0
        %v294 = vunpack.c.l.b16 %v287
        %v295 = vunpack.c.h.b16 %v287
        %v296 = vpack.c.b16 %v294, %v294
        %v297 = vpack.c.b16 %v295, %v295
        %300 = vst.msk [vmem:[#allocation2 + $0x8] sm:$0xf] %vm288, %v296
        %301 = vst.msk [vmem:[#allocation2 + $0xc] sm:$0xf] %vm288, %v297
        %v302 = vld [vmem:[#allocation2 + $0x4] sm:$0x8]
        %v303 = vld [vmem:[#allocation2 + $0x8] sm:$0xf]
        %v304 = vld [vmem:[#allocation2 + $0xc] sm:$0xf]
        %v305 = vld [vmem:[#allocation2 + $0x10] sm:$0x1]
        %v309 = vunpack.c.l.b16 %v302
        %v310 = vunpack.c.l.b16 %v303
        %v311 = vunpack.c.l.b16 %v304
        %v312 = vpack.c.b16 %v310, %v309
        %v313 = vpack.c.b16 %v311, %v311
        %v314 = vpack.c.b16 %v311, %v310
        %v316 = vshrl.u32 %v314, 16
        %v318 = vrot.slane %v316, 4
        %v319 = vshll.u32 %v314, 16
        %v321 = vrot.slane %v319, 5
        %v322 = vor.u32 %v318, %v321
        %323 = vrot.lane.b32.xlu0 %v322, 8
        %v324 = vpop.permute.xlu0 %323
        %v326 = vunpack.c.l.b16 %v305
        %v327 = vpack.c.b16 %v326, %v326
        %vm328 = vcmask 1042432
        %v329 = vrot.slane %v314, 5
        %v330 = vrot.slane %v327, 5
        %v331 = vsel %vm328, %v329, %v330
        %332 = vrot.lane.b32.xlu0 %v329, 16
        %v333 = vpop.permute.xlu0 %332
        %334 = vrot.lane.b32.xlu0 %v331, 16
        %v335 = vpop.permute.xlu0 %334
        %vm336 = vcmask 64512
        %v339 = vsel %vm336, %v312, %v324
        %v341 = vsel %vm336, %v313, %v324
        %vm342 = vcmask 130048
        %v344 = vsel %vm342, %v339, %v333
        %v346 = vsel %vm342, %v341, %v335
        %v347 = vld [vmem:[%s2] sm:$0xff]
        %v348 = vld [vmem:[%s2 + $0x8] sm:$0xff]
        %v349 = vld [vmem:[%s2 + $0x10] sm:$0xff]
        %v350 = vld [vmem:[%s3] sm:$0x3]
        %v352 = vlaneseq
        %v353 = vshrl.u32 %v352, 7
        %v354 = vsub.s32 0, %v353
        %v355 = vrot.slane %v350, %v354
        %v356 = vlaneseq
        %v357 = vshrl.u32 %v356, 7
        %v358 = vsub.s32 1, %v357
        %v359 = vrot.slane %v350, %v358
        %vm362 = vsmask.f32 4352
        %v363 = vshrl.u32 %v344, 16
        %v365 = vrot.slane %v363, 3
        %v366 = vshll.u32 %v344, 16
        %v368 = vrot.slane %v366, 4
        %v369 = vor.u32 %v365, %v368
        %v370 = vshrl.u32 %v346, 16
        %v372 = vrot.slane %v370, 3
        %v373 = vshll.u32 %v346, 16
        %v375 = vrot.slane %v373, 4
        %v376 = vor.u32 %v372, %v375
        %v377 = vsel %vm362, %v369, %v376
        %v381 = vunpack.c.l.b16 %v347
        %v382 = vunpack.c.h.b16 %v347
        %v383 = vunpack.c.l.b16 %v348
        %v384 = vunpack.c.h.b16 %v348
        %v385 = vunpack.c.l.b16 %v349
        %v386 = vunpack.c.h.b16 %v349
        %v387 = vpack.c.b16 %v383, %v381
        %v388 = vpack.c.b16 %v384, %v382
        %v389 = vpack.c.b16 %v385, %v385
        %v390 = vpack.c.b16 %v386, %v386
        %vm393 = vcmask 195584
        %v395 = vsel %vm393, %v377, 0
        %vm397 = vcmask 1043456
        %v399 = vsel %vm397, %v389, 0
        %v402 = vsel %vm397, %v390, 0
        %404 = vmatprep.subr.bf16.mxu0 0
        %405 = vmatpush1.bf16.msra.mxu0 0
        %406 = vmatprep.subr.bf16.mxu0 0
        %407 = vmatpush1.bf16.msra.mxu0 0
        %408 = vmatprep.subr.bf16.mxu0 0
        %409 = vmatpush1.bf16.msra.mxu0 0
        %410 = vmatprep.subr.bf16.mxu0 0
        %411 = vmatpush1.bf16.msra.mxu0 0
        %412 = vmatprep.subr.bf16.mxu0 0
        %413 = vmatpush1.bf16.msra.mxu0 0
        %414 = vmatprep.subr.bf16.mxu0 0
        %415 = vmatpush1.bf16.msra.mxu0 0
        %416 = vmatprep.subr.bf16.mxu0 %v402
        %417 = vmatpush1.bf16.msra.mxu0 %v399
        %418 = vmatprep.subr.bf16.mxu0 %v388
        %419 = vmatpush1.bf16.msra.mxu0 %v387
        %420 = vmatprep.subr.bf16.mxu0 0
        %421 = vmatpush2.bf16.msra.mxu0 0
        %422 = vmatprep.subr.bf16.mxu0 0
        %423 = vmatpush2.bf16.msra.mxu0 0
        %424 = vmatprep.subr.bf16.mxu0 0
        %425 = vmatpush2.bf16.msra.mxu0 0
        %426 = vmatprep.subr.bf16.mxu0 0
        %427 = vmatpush2.bf16.msra.mxu0 0
        %428 = vmatprep.subr.bf16.mxu0 0
        %429 = vmatpush2.bf16.msra.mxu0 0
        %430 = vmatprep.subr.bf16.mxu0 0
        %431 = vmatpush2.bf16.msra.mxu0 0
        %432 = vmatprep.subr.bf16.mxu0 0
        %433 = vmatpush2.bf16.msra.mxu0 0
        %434 = vmatprep.subr.bf16.mxu0 0
        %435 = vmatpush2.bf16.msra.mxu0 0
        %436 = vmatprep.mubr.bf16.mxu0 0
        %437 = vmatmul.mubr.bf16.gmra.mxu0 %v395
        %v438 = vpop.f32.mrf.mxu0
        %v439 = vadd.f32 %v355, %v438
        %v440 = vpop.f32.mrf.mxu0
        %v441 = vadd.f32 %v359, %v440
        %v442 = vpop.f32.mrf.mxu0
        %v443 = vadd.f32 %v355, %v442
        %v444 = vpop.f32.mrf.mxu0
        %v445 = vadd.f32 %v359, %v444
        %446 = vdwg.mxu0
        %v447 = vsub.f32 0.0, %v441
        %v448 = vsub.f32 0.0, %v445
        %v449 = vmul.f32 %v447, 1.442695
        %v450 = vpow.pop %v449
        %v451 = vmul.f32 %v448, 1.442695
        %v452 = vpow.pop %v451
        %v453 = vadd.f32 %v450, 1.0
        %v454 = vadd.f32 %v452, 1.0
        %v455 = vrcp.pop %v453
        %v456 = vmul.f32 1.0, %v455
        %v457 = vrcp.pop %v454
        %v458 = vmul.f32 1.0, %v457
        %v459 = vpack.c.bf16 %v272, %v271
        %v460 = vld [vmem:[%s4] sm:$0xf]
        %v461 = vld [vmem:[%s5] sm:$0x1]
        %v463 = vlaneseq
        %v464 = vshrl.u32 %v463, 7
        %v465 = vsub.s32 0, %v464
        %v466 = vrot.slane %v461, %v465
        %v469 = vsel %vm336, %v459, 0
        %v472 = vsel %vm397, %v460, 0
        %474 = vmatprep.subr.bf16.mxu0 0
        %475 = vmatpush1.bf16.msra.mxu0 0
        %476 = vmatprep.subr.bf16.mxu0 0
        %477 = vmatpush1.bf16.msra.mxu0 0
        %478 = vmatprep.subr.bf16.mxu0 0
        %479 = vmatpush1.bf16.msra.mxu0 0
        %480 = vmatprep.subr.bf16.mxu0 0
        %481 = vmatpush1.bf16.msra.mxu0 0
        %482 = vmatprep.subr.bf16.mxu0 0
        %483 = vmatpush1.bf16.msra.mxu0 0
        %484 = vmatprep.subr.bf16.mxu0 0
        %485 = vmatpush1.bf16.msra.mxu0 0
        %486 = vmatprep.subr.bf16.mxu0 0
        %487 = vmatpush1.bf16.msra.mxu0 0
        %488 = vmatprep.subr.bf16.mxu0 0
        %489 = vmatpush1.bf16.msra.mxu0 %v472
        %490 = vmatprep.subr.bf16.mxu0 0
        %491 = vmatpush2.bf16.msra.mxu0 0
        %492 = vmatprep.subr.bf16.mxu0 0
        %493 = vmatpush2.bf16.msra.mxu0 0
        %494 = vmatprep.subr.bf16.mxu0 0
        %495 = vmatpush2.bf16.msra.mxu0 0
        %496 = vmatprep.subr.bf16.mxu0 0
        %497 = vmatpush2.bf16.msra.mxu0 0
        %498 = vmatprep.subr.bf16.mxu0 0
        %499 = vmatpush2.bf16.msra.mxu0 0
        %500 = vmatprep.subr.bf16.mxu0 0
        %501 = vmatpush2.bf16.msra.mxu0 0
        %502 = vmatprep.subr.bf16.mxu0 0
        %503 = vmatpush2.bf16.msra.mxu0 0
        %504 = vmatprep.subr.bf16.mxu0 0
        %505 = vmatpush2.bf16.msra.mxu0 0
        %506 = vmatprep.mubr.bf16.mxu0 0
        %507 = vmatmul.mubr.bf16.gmra.mxu0 %v469
        %v508 = vpop.f32.mrf.mxu0
        %v509 = vadd.f32 %v466, %v508
        %v510 = vpop.f32.mrf.mxu0
        %v511 = vpop.f32.mrf.mxu0
        %v512 = vadd.f32 %v466, %v511
        %v513 = vpop.f32.mrf.mxu0
        %514 = vdwg.mxu0
        %v515 = vsub.f32 %v439, %v509
        %v516 = vsub.f32 %v443, %v512
        %v517 = vmul.f32 %v515, %v456
        %v518 = vmul.f32 %v516, %v458
        %v519 = vadd.f32 %v509, %v517
        %v520 = vadd.f32 %v512, %v518
        %v521 = vmul.f32 %v519, %v278
        %v522 = vmul.f32 %v520, %v283
        %523 = vst [vmem:[%s259] sm:$0xff] %v521
        %524 = vst [vmem:[%s259 + $0x8] sm:$0xff] %v522
        %s525 = sand.u32 %s164, 1
        %s526 = scalar_lea.sflag [#allocation4], %s525
        %s527 = sand.u32 %s164, 1
        %s528 = smul.addr %s527, 16
        %s529 = scalar_lea.vmem [#allocation3], %s528
        // Predicated region
        $region45: #{tpu_custom_call.1} parent=43 // pred_check
          %p530 = pneg %p174
        $region46: #{tpu_custom_call.1} parent=43 // pred_check_branch
          %532 = sbr.rel (%p530) target = $region48
        $region47: #{tpu_custom_call.1} parent=43 // pred_region
          %s534 = ssub.s32 256, 256
          %535 = vsyncadd %s526, %s534
          %s536 = smul.addr %s20, 2
          %s537 = smul.addr %s536, 128
          %s538 = scalar_lea.hbm %s6, %s537
          %s539 = sshll.u32 %s529, 4
          %s540 = int_to_ptr.vmem [resolvable:$true] %s539
          %545 = dma.vmem_to_hbm [thread:$0]  %s540, 256, %s538, %s526, 128, 128, 8
        $region48: #{tpu_custom_call.1} parent=43 // pred_fallthru
          _
      $region44: #{tpu_custom_call.1} parent=5 // pred_fallthru
        _
      %p546 = scmp.le.s32.totalorder 2, %s15
      // Predicated region
      $region49: #{tpu_custom_call.1} parent=5 // pred_check
        %p547 = pneg %p546
      $region50: #{tpu_custom_call.1} parent=5 // pred_check_branch
        %549 = sbr.rel (%p547) target = $region52
      $region51: #{tpu_custom_call.1} parent=5 // pred_region
        %s550 = ssub.s32 %s15, 2
        // Predicated region
        $region53: #{tpu_custom_call.1} parent=51 // pred_check
          %p551 = pneg %p180
        $region54: #{tpu_custom_call.1} parent=51 // pred_check_branch
          %553 = sbr.rel (%p551) target = $region56
        $region55: #{tpu_custom_call.1} parent=51 // pred_region
          %s554 = sand.u32 %s165, 1
          %s555 = scalar_lea.sflag [#allocation4], %s554
          %s556 = sand.u32 %s165, 1
          %s557 = smul.addr %s556, 16
          %s558 = scalar_lea.vmem [#allocation3], %s557
          %559 = dma.done %s555, 256
        $region56: #{tpu_custom_call.1} parent=51 // pred_fallthru
          _
      $region52: #{tpu_custom_call.1} parent=5 // pred_fallthru
        _
    $region6: #{tpu_custom_call.1} parent=1 // loop_footer
      %s19 = sadd.s32 1, %s15
    $region7: #{tpu_custom_call.1} parent=1 // loop_footer_branch
      %14 = sbr.rel target = $region3
    $region8: #{tpu_custom_call.1} parent=1 // loop_exit
      _
    %560 = vsyncpa [#allocation4], 1
    %s561 = scalar_lea.sflag [#allocation4], 1
    %562 = vsyncpa %s561, 1

</llo_original>
